<compile_context>
chip_gen: v7x
topology: tpu7x:2x2x1
jax: 0.10.0
libtpu: 0.0.40
codegen_flags: <defaults>
</compile_context>

<pallas_src>
import functools
import math

import jax
import jax.numpy as jnp
from jax.experimental import pallas as pl
from jax.experimental.pallas import tpu as pltpu


def _packed_linear_kernel(x_ref, w_ref, b_ref, o_ref):
    # x_ref: (tile_r, K)  packed edge attrs (PACK edges per row)
    # w_ref: (K, N)       block-diagonal kron(I_PACK, W^T), resident across grid
    # b_ref: (1, N)       bias tiled PACK times
    # o_ref: (tile_r, N)  packed outputs; N is a multiple of 128 lanes
    acc = jnp.dot(x_ref[...], w_ref[...], preferred_element_type=jnp.float32)
    o_ref[...] = (acc + b_ref[...]).astype(o_ref.dtype)


def _choose_pack(in_dim, emb_dim):
    """Edges packed per row so the packed output width is a multiple of 128."""
    base = 128 // math.gcd(emb_dim, 128)
    if base * emb_dim > 1024:  # degenerate emb_dim: fall back to unpacked path
        return 1
    pack = base
    # Widen a bit so each MXU push / DMA row carries more useful work.
    while pack * emb_dim < 256 and 2 * pack * in_dim <= 128:
        pack *= 2
    return pack


@functools.partial(jax.jit, static_argnames=("tile_r",))
def linear_edge_encoder(edge_attr, weight, bias, *, tile_r=1024):
    """edge_attr: [..., in_dim] (flattened like torch .view(-1, in_dim))
       weight:    [emb_dim, in_dim]  (PyTorch nn.Linear layout)
       bias:      [emb_dim]
       returns    [E, emb_dim]
    """
    emb_dim, in_dim = weight.shape
    x = edge_attr.reshape(-1, in_dim)
    E = x.shape[0]

    pack = _choose_pack(in_dim, emb_dim)
    k_dim = pack * in_dim
    n_dim = pack * emb_dim

    # Pad only the (cheap, in_dim-float) input rows up to a multiple of `pack`;
    # the 16x-larger output never gets a pad/slice pass when E % pack == 0.
    e_pack = pl.cdiv(E, pack) * pack
    if e_pack != E:
        x = jnp.pad(x, ((0, e_pack - E), (0, 0)))
    rows = e_pack // pack
    x_packed = x.reshape(rows, k_dim)

    # Block-diagonal packed weight / tiled bias (tiny; built under jit).
    w_packed = jnp.kron(jnp.eye(pack, dtype=weight.dtype), weight.T)  # (K, N)
    b_packed = jnp.tile(bias, pack).reshape(1, n_dim)                 # (1, N)

    # Sublane-aligned row tile; shrink for tiny graphs, default 8192 edges/step.
    tile_r = max(8, min(tile_r, ((rows + 7) // 8) * 8))
    grid = (pl.cdiv(rows, tile_r),)

    # Raise scoped VMEM only if a large tile sweep needs it (double-buffered
    # in/out + resident packed weight/bias).  Demo footprint is ~tens of KiB.
    bytes_per_step = 2 * 4 * tile_r * (k_dim + n_dim) + 4 * (k_dim + 1) * n_dim
    cp_kwargs = dict(dimension_semantics=("parallel",))
    if bytes_per_step > 12 * 1024 * 1024:
        cp_kwargs["vmem_limit_bytes"] = min(bytes_per_step + (4 << 20), 64 << 20)

    out_packed = pl.pallas_call(
        _packed_linear_kernel,
        out_shape=jax.ShapeDtypeStruct((rows, n_dim), x.dtype),
        grid_spec=pltpu.PrefetchScalarGridSpec(
            num_scalar_prefetch=0,
            grid=grid,
            in_specs=[
                pl.BlockSpec((tile_r, k_dim), lambda i: (i, 0)),
                pl.BlockSpec((k_dim, n_dim), lambda i: (0, 0)),
                pl.BlockSpec((1, n_dim), lambda i: (0, 0)),
            ],
            out_specs=pl.BlockSpec((tile_r, n_dim), lambda i: (i, 0)),
        ),
        compiler_params=pltpu.CompilerParams(**cp_kwargs),
    )(x_packed, w_packed, b_packed)

    # Contiguous reshape back to per-edge layout (free, no data movement).
    out = out_packed.reshape(e_pack, emb_dim)
    if e_pack != E:
        out = out[:E]  # only on ragged E; costs one output copy
    return out


if __name__ == "__main__":
    # Synthetic config: cfg.dataset.name.startswith('attributed_triangle-')
    # => in_dim = 2; choose emb_dim = 32. Number of edges E = 200.
    in_dim = 2
    emb_dim = 32
    num_edges = 200

    key = jax.random.PRNGKey(0)
    k_x, k_w, k_b = jax.random.split(key, 3)

    # Inputs: edge_attr already shaped [E, in_dim]; .view(-1, in_dim) is a no-op.
    edge_attr = jax.random.normal(k_x, (num_edges, in_dim), dtype=jnp.float32)

    # Deterministic nn.Linear-style init: U(-1/sqrt(in_dim), 1/sqrt(in_dim)).
    bound = 1.0 / (in_dim ** 0.5)
    weight = jax.random.uniform(k_w, (emb_dim, in_dim), jnp.float32, -bound, bound)
    bias = jax.random.uniform(k_b, (emb_dim,), jnp.float32, -bound, bound)

    out = linear_edge_encoder(edge_attr, weight, bias)
    out = jax.block_until_ready(out)

    # Reference check in plain JAX.
    ref = edge_attr @ weight.T + bias
    assert out.shape == (num_edges, emb_dim)
    assert jnp.allclose(out, ref, atol=1e-4, rtol=1e-4), float(
        jnp.max(jnp.abs(out - ref))
    )

    print("KERNEL_OK")
</pallas_src>

<mosaic_0001>
module attributes {stable_mosaic.version = 11 : i64} {
  func.func @_packed_linear_kernel(%arg0: i32, %arg1: memref<32x16xf32, #tpu.memory_space<vmem>>, %arg2: memref<16x256xf32, #tpu.memory_space<vmem>>, %arg3: memref<1x256xf32, #tpu.memory_space<vmem>>, %arg4: memref<32x256xf32, #tpu.memory_space<vmem>>) attributes {dimension_semantics = [#tpu.dimension_semantics<parallel>], iteration_bounds = array<i64: 1>, scalar_prefetch = 0 : i64, scratch_operands = 0 : i64, tpu.core_type = #tpu.core_type<tc>, window_params = [{transform_indices = @transform_0, window_bounds = array<i64: 32, 16>}, {pipeline_mode = #tpu.pipeline_mode<synchronous>, transform_indices = @transform_1, window_bounds = array<i64: 16, 256>}, {pipeline_mode = #tpu.pipeline_mode<synchronous>, transform_indices = @transform_2, window_bounds = array<i64: 1, 256>}, {transform_indices = @transform_3, window_bounds = array<i64: 32, 256>}]} {
    %c0 = arith.constant 0 : index
    %c0_0 = arith.constant 0 : index
    %0 = vector.load %arg1[%c0, %c0_0] : memref<32x16xf32, #tpu.memory_space<vmem>>, vector<32x16xf32>
    %c0_1 = arith.constant 0 : index
    %c0_2 = arith.constant 0 : index
    %1 = vector.load %arg2[%c0_1, %c0_2] : memref<16x256xf32, #tpu.memory_space<vmem>>, vector<16x256xf32>
    %cst = arith.constant dense<0.000000e+00> : vector<32x256xf32>
    %2 = tpu.matmul %0, %1, %cst {dimension_numbers = #tpu.dot_dimension_numbers<[1], [0], [0], [1], [0, 0, 1, 1], [], []>} : vector<32x16xf32>, vector<16x256xf32>, vector<32x256xf32> -> vector<32x256xf32>
    %c0_3 = arith.constant 0 : index
    %c0_4 = arith.constant 0 : index
    %3 = vector.load %arg3[%c0_3, %c0_4] : memref<1x256xf32, #tpu.memory_space<vmem>>, vector<1x256xf32>
    %4 = vector.broadcast %3 : vector<1x256xf32> to vector<32x256xf32>
    %5 = arith.addf %2, %4 : vector<32x256xf32>
    %c0_5 = arith.constant 0 : index
    %c0_6 = arith.constant 0 : index
    %6 = vector.load %arg4[%c0_5, %c0_6] : memref<32x256xf32, #tpu.memory_space<vmem>>, vector<32x256xf32>
    tpu.vector_store %arg4[%c0_5, %c0_6], %5 {strides = array<i32>} : memref<32x256xf32, #tpu.memory_space<vmem>>, vector<32x256xf32>,
    return
  }
  func.func @transform_0(%arg0: i32) -> (i32, i32) {
    %c0_i32 = arith.constant 0 : i32
    %c0_i32_0 = arith.constant 0 : i32
    return %arg0, %c0_i32 : i32, i32
  }
  func.func @transform_1(%arg0: i32) -> (i32, i32) {
    %c0_i32 = arith.constant 0 : i32
    %c0_i32_0 = arith.constant 0 : i32
    %c0_i32_1 = arith.constant 0 : i32
    return %c0_i32, %c0_i32_0 : i32, i32
  }
  func.func @transform_2(%arg0: i32) -> (i32, i32) {
    %c0_i32 = arith.constant 0 : i32
    %c0_i32_0 = arith.constant 0 : i32
    %c0_i32_1 = arith.constant 0 : i32
    return %c0_i32, %c0_i32_0 : i32, i32
  }
  func.func @transform_3(%arg0: i32) -> (i32, i32) {
    %c0_i32 = arith.constant 0 : i32
    %c0_i32_0 = arith.constant 0 : i32
    return %arg0, %c0_i32 : i32, i32
  }
}

</mosaic_0001>

<llo_original>
// kernel: tile.8
$region0: #{tile.8}
  #allocation0 [shape = 's32[1]{0}', space=sflag, size = 0x4, scoped, tag = 'scoped memory for tile.8']
  %s0 = inlined_call_operand.vmem [shape: f32[32], index: 0, kind: input, shape index: {}]
  %s1 = inlined_call_operand.vmem [shape: f32[8,32], index: 1, kind: output, shape index: {}]
  // Predicated region
  $region2: #{tile.8} parent=0 // pred_check
    _
  $region3: #{tile.8} parent=0 // pred_check_branch
    %3 = sbr.rel (0) target = $region5
  $region4: #{tile.8} parent=0 // pred_region
    _
  $region5: #{tile.8} parent=0 // pred_fallthru
    _
  %v4 = vld [vmem:[%s0] ss:$0 sm:$0xff]
  %5 = vst [vmem:[%s1] sm:$0xff] %v4

// kernel: tile.9
$region0: #{tile.9}
  %s0 = inlined_call_operand.vmem [shape: f32[8,32], index: 0, kind: input, shape index: {}]
  %s1 = inlined_call_operand.vmem [shape: f32[1,256], index: 1, kind: output, shape index: {}]
  $region1: #{tile.9} parent=0
    #allocation0 [shape = 'u8[8192]{0}', space=vmem, size = 0x2000, scoped, tag = 'scoped mem for output reshape']
    %s2 = smov 3
    %v3 = vld [vmem:[%s0] ss:$4 sm:%s2]
    %vm4 = vcmask 261120
    %5 = vst.msk [vmem:[#allocation0] ss:$8 sm:$0x3] %vm4, %v3
    %s6 = scalar_lea.vmem %s0, 3
    %s7 = smov 3
    %v8 = vld [vmem:[%s6] ss:$4 sm:%s7]
    %9 = vrot.lane.b32.xlu0 %v8, 96
    %v10 = vpop.permute.xlu0 %9
    %vm11 = vcmask 1048320
    %12 = vst.msk [vmem:[#allocation0] ss:$8 sm:$0x3] %vm11, %v10
    %s13 = scalar_lea.vmem %s0, 2
    %s14 = smov 3
    %v15 = vld [vmem:[%s13] ss:$4 sm:%s14]
    %16 = vrot.lane.b32.xlu0 %v15, 64
    %v17 = vpop.permute.xlu0 %16
    %vm18 = vcmask 785920
    %19 = vst.msk [vmem:[#allocation0] ss:$8 sm:$0x3] %vm18, %v17
    %s20 = scalar_lea.vmem %s0, 1
    %s21 = smov 3
    %v22 = vld [vmem:[%s20] ss:$4 sm:%s21]
    %23 = vrot.lane.b32.xlu0 %v22, 32
    %v24 = vpop.permute.xlu0 %23
    %vm25 = vcmask 523520
    %26 = vst.msk [vmem:[#allocation0] ss:$8 sm:$0x3] %vm25, %v24
    %s28 = sshllo.u32 0, 1
    %v30 = vld [vmem:[#allocation0] sm:%s28]
    %s31 = sshllo.u32 0, 1
    %32 = vst [vmem:[%s1] sm:%s31] %v30
    %s33 = scalar_lea.vmem [#allocation0], 8
    %v34 = vld [vmem:[%s33] sm:%s28]
    %s35 = sshllo.u32 0, 1
    %s36 = scalar_lea.vmem %s1, 1
    %37 = vst [vmem:[%s36] sm:%s35] %v34

// kernel: linear_edge_encoder.1
$region0: #{linear_edge_encoder.1}
  #allocation0 [shape = 'u32[]', space=smem, size = 0x4, offset = 0x4, fixed_abs, tag = 'smem constant byte address 0x4 - core index']
  #allocation1 [shape = 'u32[144,128]{1,0:T(1,128)}', space=vmem, size = 0x12000, scoped, tag = 'internal scratch']
  %s0 = inlined_call_operand.vmem [shape: f32[25,16], index: 0, kind: input, shape index: {}]
  %s1 = inlined_call_operand.vmem [shape: f32[16,256], index: 1, kind: input, shape index: {}]
  %s2 = inlined_call_operand.vmem [shape: f32[1,256], index: 2, kind: input, shape index: {}]
  %s3 = inlined_call_operand.vmem [shape: f32[25,256], index: 3, kind: output, shape index: {}]
  %s4 = sld [smem:[#allocation0]]
  $region22: #{linear_edge_encoder.1} parent=0
    _
  %s6 = ssub.s32 1, %s4
  %s7 = scalar_select 0, %s6, %s4
  // Predicated region
  $region2: #{linear_edge_encoder.1} parent=0 // pred_check
    _
  $region3: #{linear_edge_encoder.1} parent=0 // pred_check_branch
    %9 = sbr.rel (0) target = $region5
  $region4: #{linear_edge_encoder.1} parent=0 // pred_region
    _
  $region5: #{linear_edge_encoder.1} parent=0 // pred_fallthru
    _
  // Predicated region
  $region6: #{linear_edge_encoder.1} parent=0 // pred_check
    _
  $region7: #{linear_edge_encoder.1} parent=0 // pred_check_branch
    %11 = sbr.rel (0) target = $region9
  $region8: #{linear_edge_encoder.1} parent=0 // pred_region
    _
  $region9: #{linear_edge_encoder.1} parent=0 // pred_fallthru
    _
  // Predicated region
  $region10: #{linear_edge_encoder.1} parent=0 // pred_check
    _
  $region11: #{linear_edge_encoder.1} parent=0 // pred_check_branch
    %13 = sbr.rel (0) target = $region13
  $region12: #{linear_edge_encoder.1} parent=0 // pred_region
    _
  $region13: #{linear_edge_encoder.1} parent=0 // pred_fallthru
    _
  %v14 = vld [vmem:[%s0] sm:$0xff]
  %v15 = vld [vmem:[%s0 + $0x8] sm:$0xff]
  %v16 = vld [vmem:[%s0 + $0x10] sm:$0xff]
  %v17 = vld [vmem:[%s0 + $0x18] sm:$0xff]
  %v18 = vld [vmem:[%s1] sm:$0xff]
  %v19 = vld [vmem:[%s1 + $0x8] sm:$0xff]
  %v20 = vld [vmem:[%s1 + $0x10] sm:$0xff]
  %v21 = vld [vmem:[%s1 + $0x18] sm:$0xff]
  %v22 = vld [vmem:[%s2] sm:$0x3]
  %v24 = vlaneseq
  %v25 = vshrl.u32 %v24, 7
  %v26 = vsub.s32 0, %v25
  %v27 = vrot.slane %v22, %v26
  %v28 = vlaneseq
  %v29 = vshrl.u32 %v28, 7
  %v30 = vsub.s32 1, %v29
  %v31 = vrot.slane %v22, %v30
  %vm34 = vcmask 130048
  %v36 = vsel %vm34, %v14, 0
  %v39 = vsel %vm34, %v15, 0
  %v42 = vsel %vm34, %v16, 0
  %v45 = vsel %vm34, %v17, 0
  %47 = vmatprep.subr.mxu0 %v19
  %48 = vmatpush1.msra.mxu0 %v18
  %49 = vmatprep.subr.mxu0 %v21
  %50 = vmatpush1.msra.mxu0 %v20
  %51 = vmatprep.subr.mxu0 0.0
  %52 = vmatpush1.msra.mxu0 0.0
  %53 = vmatprep.subr.mxu0 0.0
  %54 = vmatpush1.msra.mxu0 0.0
  %55 = vmatprep.subr.mxu0 0.0
  %56 = vmatpush1.msra.mxu0 0.0
  %57 = vmatprep.subr.mxu0 0.0
  %58 = vmatpush1.msra.mxu0 0.0
  %59 = vmatprep.subr.mxu0 0.0
  %60 = vmatpush1.msra.mxu0 0.0
  %61 = vmatprep.subr.mxu0 0.0
  %62 = vmatpush1.msra.mxu0 0.0
  %63 = vmatprep.subr.mxu0 0.0
  %64 = vmatpush1.msra.mxu0 0.0
  %65 = vmatprep.subr.mxu0 0.0
  %66 = vmatpush1.msra.mxu0 0.0
  %67 = vmatprep.subr.mxu0 0.0
  %68 = vmatpush1.msra.mxu0 0.0
  %69 = vmatprep.subr.mxu0 0.0
  %70 = vmatpush1.msra.mxu0 0.0
  %71 = vmatprep.subr.mxu0 0.0
  %72 = vmatpush1.msra.mxu0 0.0
  %73 = vmatprep.subr.mxu0 0.0
  %74 = vmatpush1.msra.mxu0 0.0
  %75 = vmatprep.subr.mxu0 0.0
  %76 = vmatpush1.msra.mxu0 0.0
  %77 = vmatprep.subr.mxu0 0.0
  %78 = vmatpush1.msra.mxu0 0.0
  %79 = vmatprep.subr.mxu0 0.0
  %80 = vmatpush1.msra.mxu0 0.0
  %81 = vmatprep.subr.mxu0 0.0
  %82 = vmatpush1.msra.mxu0 0.0
  %83 = vmatprep.subr.mxu0 0.0
  %84 = vmatpush1.msra.mxu0 0.0
  %85 = vmatprep.subr.mxu0 0.0
  %86 = vmatpush1.msra.mxu0 0.0
  %87 = vmatprep.subr.mxu0 0.0
  %88 = vmatpush1.msra.mxu0 0.0
  %89 = vmatprep.subr.mxu0 0.0
  %90 = vmatpush1.msra.mxu0 0.0
  %91 = vmatprep.subr.mxu0 0.0
  %92 = vmatpush1.msra.mxu0 0.0
  %93 = vmatprep.subr.mxu0 0.0
  %94 = vmatpush1.msra.mxu0 0.0
  %95 = vmatprep.subr.mxu0 0.0
  %96 = vmatpush1.msra.mxu0 0.0
  %97 = vmatprep.subr.mxu0 0.0
  %98 = vmatpush1.msra.mxu0 0.0
  %99 = vmatprep.subr.mxu0 0.0
  %100 = vmatpush1.msra.mxu0 0.0
  %101 = vmatprep.subr.mxu0 0.0
  %102 = vmatpush1.msra.mxu0 0.0
  %103 = vmatprep.subr.mxu0 0.0
  %104 = vmatpush1.msra.mxu0 0.0
  %105 = vmatprep.subr.mxu0 0.0
  %106 = vmatpush1.msra.mxu0 0.0
  %107 = vmatprep.subr.mxu0 0.0
  %108 = vmatpush1.msra.mxu0 0.0
  %109 = vmatprep.subr.mxu0 0.0
  %110 = vmatpush1.msra.mxu0 0.0
  %111 = vmatprep.mubr.f32.mxu0 0.0
  %112 = vmatmul.mubr.f32.gmra.mrb[0].mxu0 %v36
  %v113 = vpop.f32.mrb[0].mxu0
  %v114 = vadd.f32 %v27, %v113
  %v115 = vpop.f32.mrb[0].mxu0
  %v116 = vadd.f32 %v31, %v115
  %117 = vmatprep.mubr.f32.mxu0 0.0
  %118 = vmatmul.mubr.f32.gmra.mrb[0].mxu0 %v39
  %v119 = vpop.f32.mrb[0].mxu0
  %v120 = vadd.f32 %v27, %v119
  %v121 = vpop.f32.mrb[0].mxu0
  %v122 = vadd.f32 %v31, %v121
  %123 = vmatprep.mubr.f32.mxu0 0.0
  %124 = vmatmul.mubr.f32.gmra.mrb[0].mxu0 %v42
  %v125 = vpop.f32.mrb[0].mxu0
  %v126 = vadd.f32 %v27, %v125
  %v127 = vpop.f32.mrb[0].mxu0
  %v128 = vadd.f32 %v31, %v127
  %129 = vmatprep.mubr.f32.mxu0 0.0
  %130 = vmatmul.mubr.f32.gmra.mrb[0].mxu0 %v45
  %v131 = vpop.f32.mrb[0].mxu0
  %v132 = vadd.f32 %v27, %v131
  %v133 = vpop.f32.mrb[0].mxu0
  %v134 = vadd.f32 %v31, %v133
  %135 = vdwg.mxu0
  %136 = vst [vmem:[%s3] sm:$0xff] %v114
  %137 = vst [vmem:[%s3 + $0x8] sm:$0xff] %v116
  %138 = vst [vmem:[%s3 + $0x10] sm:$0xff] %v120
  %139 = vst [vmem:[%s3 + $0x18] sm:$0xff] %v122
  %140 = vst [vmem:[%s3 + $0x20] sm:$0xff] %v126
  %141 = vst [vmem:[%s3 + $0x28] sm:$0xff] %v128
  %142 = vst [vmem:[%s3 + $0x30] sm:$0xff] %v132
  %143 = vst [vmem:[%s3 + $0x38] sm:$0xff] %v134
  // Predicated region
  $region14: #{linear_edge_encoder.1} parent=0 // pred_check
    _
  $region15: #{linear_edge_encoder.1} parent=0 // pred_check_branch
    %145 = sbr.rel (0) target = $region17
  $region16: #{linear_edge_encoder.1} parent=0 // pred_region
    _
  $region17: #{linear_edge_encoder.1} parent=0 // pred_fallthru
    _
  // Predicated region
  $region18: #{linear_edge_encoder.1} parent=0 // pred_check
    _
  $region19: #{linear_edge_encoder.1} parent=0 // pred_check_branch
    %147 = sbr.rel (0) target = $region21
  $region20: #{linear_edge_encoder.1} parent=0 // pred_region
    _
  $region21: #{linear_edge_encoder.1} parent=0 // pred_fallthru
    _

</llo_original>
